<compile_context>
chip_gen: v7x
topology: tpu7x:2x2x1
jax: 0.10.0
libtpu: 0.0.40
codegen_flags: <defaults>
</compile_context>

<pallas_src>
import jax
import jax.numpy as jnp
from jax.experimental import pallas as pl
from jax.experimental.pallas import tpu as pltpu


def _sub_abs_kernel(a_ref, b_ref, o_ref):
    # (TR, COLS) VMEM tiles. Upcast (if any) happens in VMEM so the narrower
    # dtype is what travels over HBM; sub + abs are cheap VPU ops.
    a = a_ref[...].astype(o_ref.dtype)
    b = b_ref[...].astype(o_ref.dtype)
    o_ref[...] = jnp.abs(a - b)


def _round_up(x, m):
    return (x + m - 1) // m * m


def image_sub_abs(img1, img2, *, max_cols=2048, max_rows_per_tile=512,
                  min_pallas_bytes=1 << 18):
    """JAX/Pallas equivalent of ImageSubAbs.forward(img1, img2)."""
    img1 = jnp.asarray(img1)
    img2 = jnp.asarray(img2)
    out_dtype = jnp.result_type(img1.dtype, img2.dtype)

    # Shape broadcasting: let XLA's fused elementwise handle it.  Materializing
    # broadcast_to in HBM in front of an opaque pallas_call would add a full
    # extra read+write pass of the broadcast operand.
    if img1.shape != img2.shape:
        return jnp.abs(img1.astype(out_dtype) - img2.astype(out_dtype))

    shape = img1.shape
    total = int(img1.size)
    out_itemsize = jnp.dtype(out_dtype).itemsize

    # Fallbacks where a single fused XLA op is strictly better than Pallas +
    # wrapper copies: empty / tiny inputs, or flat sizes not divisible by 128
    # (which would force pad + slice passes).  NCHW image tensors essentially
    # always satisfy total % 128 == 0.
    if total == 0 or total % 128 != 0 or total * out_itemsize < min_pallas_bytes:
        return jnp.abs(img1.astype(out_dtype) - img2.astype(out_dtype))

    # --- Lane-dense (rows, cols) slab with cols a multiple of 128 dividing
    # `total` exactly -> zero padding, zero output slicing.
    max_cols = max(128, (max_cols // 128) * 128)
    cols = 128
    for c in range(min(max_cols, total), 127, -128):
        if total % c == 0:
            cols = c
            break
    rows = total // cols

    # Keep tiles around max_rows_per_tile * max_cols elements (~4 MiB f32)
    # regardless of which `cols` divisor was found.
    row_budget = max(8, (((max_rows_per_tile * max_cols) // cols) // 8) * 8)
    if rows <= row_budget:
        tr = rows              # block == full dim along sublanes (legal)
    else:
        tr = row_budget        # multiple of 8 -> legal sublane tiling

    grid_rows = pl.cdiv(rows, tr)
    # v7x has 2 TensorCores; give a "parallel" grid at least 2 blocks when the
    # data is big enough to split on a sublane (8-row) boundary.
    if grid_rows < 2 and rows >= 16:
        tr = _round_up(pl.cdiv(rows, 2), 8)
        grid_rows = pl.cdiv(rows, tr)

    a2 = img1.reshape(rows, cols)
    b2 = img2.reshape(rows, cols)

    bytes_accessed = total * (img1.dtype.itemsize + img2.dtype.itemsize
                              + out_itemsize)

    out2 = pl.pallas_call(
        _sub_abs_kernel,
        out_shape=jax.ShapeDtypeStruct((rows, cols), out_dtype),
        grid=(grid_rows,),
        in_specs=[
            pl.BlockSpec((tr, cols), lambda i: (i, 0)),   # img1 tile
            pl.BlockSpec((tr, cols), lambda i: (i, 0)),   # img2 tile
        ],
        out_specs=pl.BlockSpec((tr, cols), lambda i: (i, 0)),
        compiler_params=pltpu.CompilerParams(
            dimension_semantics=("parallel",),
        ),
        cost_estimate=pl.CostEstimate(
            flops=2 * total, transcendentals=0, bytes_accessed=bytes_accessed),
    )(a2, b2)

    return out2.reshape(shape)


if __name__ == "__main__":
    key = jax.random.PRNGKey(0)
    k1, k2, k3, k4, k5, k6 = jax.random.split(key, 6)

    # Small shape consistent with the module (batch=2, channels=4, 16x16).
    # Force the Pallas path so the kernel itself is exercised at this size.
    img1 = jax.random.normal(k1, (2, 4, 16, 16), dtype=jnp.float32)
    img2 = jax.random.normal(k2, (2, 4, 16, 16), dtype=jnp.float32)
    out = jax.block_until_ready(image_sub_abs(img1, img2, min_pallas_bytes=0))
    ref = jnp.abs(img1 - img2)
    assert out.shape == ref.shape, f"shape mismatch: {out.shape} vs {ref.shape}"
    assert out.dtype == ref.dtype
    assert jnp.allclose(out, ref, atol=1e-6), "mismatch vs jnp.abs(img1 - img2)"

    # Larger image that takes the default Pallas path with a multi-block grid.
    a = jax.random.normal(k3, (2, 4, 128, 128), dtype=jnp.float32)
    b = jax.random.normal(k4, (2, 4, 128, 128), dtype=jnp.float32)
    out_big = jax.block_until_ready(image_sub_abs(a, b))
    assert jnp.allclose(out_big, jnp.abs(a - b), atol=1e-6), "mismatch (large)"

    # Mixed dtypes: bf16 streamed narrow from HBM, upcast inside the kernel.
    c = jax.random.normal(k5, (2, 4, 16, 16), dtype=jnp.bfloat16)
    d = jax.random.normal(k6, (2, 4, 16, 16), dtype=jnp.float32)
    out_mixed = jax.block_until_ready(image_sub_abs(c, d, min_pallas_bytes=0))
    ref_mixed = jnp.abs(c.astype(jnp.float32) - d)
    assert out_mixed.dtype == jnp.float32
    assert jnp.allclose(out_mixed, ref_mixed, atol=1e-2), "mismatch (mixed dtype)"

    # Ragged / non-128-divisible shape: takes the fused-XLA fallback path.
    e = jax.random.normal(k1, (3, 5, 7, 11), dtype=jnp.float32)
    f = jax.random.normal(k2, (3, 5, 7, 11), dtype=jnp.float32)
    out_ragged = jax.block_until_ready(image_sub_abs(e, f))
    assert jnp.allclose(out_ragged, jnp.abs(e - f), atol=1e-6), "mismatch (ragged)"

    print("KERNEL_OK")
</pallas_src>

<mosaic_0001>
module attributes {stable_mosaic.version = 11 : i64} {
  func.func @_sub_abs_kernel(%arg0: i32, %arg1: memref<1x2048xf32, #tpu.memory_space<vmem>>, %arg2: memref<1x2048xf32, #tpu.memory_space<vmem>>, %arg3: memref<1x2048xf32, #tpu.memory_space<vmem>>) attributes {dimension_semantics = [#tpu.dimension_semantics<parallel>], iteration_bounds = array<i64: 1>, scalar_prefetch = 0 : i64, scratch_operands = 0 : i64, tpu.core_type = #tpu.core_type<tc>, window_params = [{transform_indices = @transform_0, window_bounds = array<i64: 1, 2048>}, {transform_indices = @transform_1, window_bounds = array<i64: 1, 2048>}, {transform_indices = @transform_2, window_bounds = array<i64: 1, 2048>}]} {
    %c0 = arith.constant 0 : index
    %c0_0 = arith.constant 0 : index
    %0 = vector.load %arg1[%c0, %c0_0] : memref<1x2048xf32, #tpu.memory_space<vmem>>, vector<1x2048xf32>
    %c0_1 = arith.constant 0 : index
    %c0_2 = arith.constant 0 : index
    %1 = vector.load %arg2[%c0_1, %c0_2] : memref<1x2048xf32, #tpu.memory_space<vmem>>, vector<1x2048xf32>
    %2 = arith.subf %0, %1 : vector<1x2048xf32>
    %3 = math.absf %2 : vector<1x2048xf32>
    %c0_3 = arith.constant 0 : index
    %c0_4 = arith.constant 0 : index
    %4 = vector.load %arg3[%c0_3, %c0_4] : memref<1x2048xf32, #tpu.memory_space<vmem>>, vector<1x2048xf32>
    tpu.vector_store %arg3[%c0_3, %c0_4], %3 {strides = array<i32>} : memref<1x2048xf32, #tpu.memory_space<vmem>>, vector<1x2048xf32>,
    return
  }
  func.func @transform_0(%arg0: i32) -> (i32, i32) {
    %c0_i32 = arith.constant 0 : i32
    %c0_i32_0 = arith.constant 0 : i32
    return %arg0, %c0_i32 : i32, i32
  }
  func.func @transform_1(%arg0: i32) -> (i32, i32) {
    %c0_i32 = arith.constant 0 : i32
    %c0_i32_0 = arith.constant 0 : i32
    return %arg0, %c0_i32 : i32, i32
  }
  func.func @transform_2(%arg0: i32) -> (i32, i32) {
    %c0_i32 = arith.constant 0 : i32
    %c0_i32_0 = arith.constant 0 : i32
    return %arg0, %c0_i32 : i32, i32
  }
}

</mosaic_0001>

<llo_original>
// kernel: tpu_custom_call.1
$region0: #{tpu_custom_call.1}
  #allocation0 [shape = 'u32[]', space=smem, size = 0x4, offset = 0x4, fixed_abs, tag = 'smem constant byte address 0x4 - core index']
  #allocation1 [shape = 'u32[144,128]{1,0:T(1,128)}', space=vmem, size = 0x12000, scoped, tag = 'internal scratch']
  %s0 = inlined_call_operand.hbm [shape: f32[1,2048], index: 0, kind: input, shape index: {}]
  %s1 = inlined_call_operand.hbm [shape: f32[1,2048], index: 1, kind: input, shape index: {}]
  %s2 = inlined_call_operand.hbm [shape: f32[1,2048], index: 2, kind: output, shape index: {}]
  %s3 = sld [smem:[#allocation0]]
  $region26: #{tpu_custom_call.1} parent=0
    _
  %s5 = ssub.s32 1, %s3
  %s6 = scalar_select 0, %s5, %s3
  $region1: #{tpu_custom_call.1} parent=0
    #allocation2 [shape = 'u8[8192]{0}', space=vmem, size = 0x2000, scoped, tag = 'input window, operand 0, single buffered']
    #allocation3 [shape = 's32[1]{0}', space=sflag, size = 0x4, scoped, tag = 'scoped memory for tpu_custom_call.1']
    #allocation4 [shape = 's32[1]{0}', space=sflag, size = 0x4, scoped, tag = 'scoped memory for tpu_custom_call.1']
    #allocation5 [shape = 'u8[8192]{0}', space=vmem, size = 0x2000, scoped, tag = 'input window, operand 1, single buffered']
    #allocation6 [shape = 's32[1]{0}', space=sflag, size = 0x4, scoped, tag = 'scoped memory for tpu_custom_call.1']
    #allocation7 [shape = 'u8[8192]{0}', space=vmem, size = 0x2000, scoped, tag = 'output window, operand 0, single buffered']
    %7 = vsyncpa [#allocation3], 0
    %8 = vsyncpa [#allocation6], 0
    %9 = vsyncpa [#allocation4], 0
    // Predicated region
    $region2: #{tpu_custom_call.1} parent=1 // pred_check
      _
    $region3: #{tpu_custom_call.1} parent=1 // pred_check_branch
      %11 = sbr.rel (0) target = $region5
    $region4: #{tpu_custom_call.1} parent=1 // pred_region
      %s13 = ssub.s32 256, 256
      %14 = vsyncadd [#allocation3], %s13
      %s16 = sshll.u32 [#allocation2], 4
      %s17 = int_to_ptr.vmem [resolvable:$true] %s16
      %19 = dma.hbm_to_vmem [thread:$0]  %s0, 256, %s17, [#allocation3]
    $region5: #{tpu_custom_call.1} parent=1 // pred_fallthru
      _
    // Predicated region
    $region6: #{tpu_custom_call.1} parent=1 // pred_check
      _
    $region7: #{tpu_custom_call.1} parent=1 // pred_check_branch
      %21 = sbr.rel (0) target = $region9
    $region8: #{tpu_custom_call.1} parent=1 // pred_region
      %s23 = ssub.s32 256, 256
      %24 = vsyncadd [#allocation6], %s23
      %s26 = sshll.u32 [#allocation5], 4
      %s27 = int_to_ptr.vmem [resolvable:$true] %s26
      %29 = dma.hbm_to_vmem [thread:$0]  %s1, 256, %s27, [#allocation6]
    $region9: #{tpu_custom_call.1} parent=1 // pred_fallthru
      _
    // Predicated region
    $region10: #{tpu_custom_call.1} parent=1 // pred_check
      _
    $region11: #{tpu_custom_call.1} parent=1 // pred_check_branch
      %31 = sbr.rel (0) target = $region13
    $region12: #{tpu_custom_call.1} parent=1 // pred_region
      %32 = dma.done [#allocation3], 256
    $region13: #{tpu_custom_call.1} parent=1 // pred_fallthru
      _
    // Predicated region
    $region14: #{tpu_custom_call.1} parent=1 // pred_check
      _
    $region15: #{tpu_custom_call.1} parent=1 // pred_check_branch
      %34 = sbr.rel (0) target = $region17
    $region16: #{tpu_custom_call.1} parent=1 // pred_region
      %35 = dma.done [#allocation6], 256
    $region17: #{tpu_custom_call.1} parent=1 // pred_fallthru
      _
    %v36 = vld [vmem:[#allocation2] sm:$0xff]
    %v37 = vld [vmem:[#allocation2 + $0x8] sm:$0xff]
    %v38 = vld [vmem:[#allocation5] sm:$0xff]
    %v39 = vld [vmem:[#allocation5 + $0x8] sm:$0xff]
    %v40 = vsub.f32 %v36, %v38
    %v41 = vsub.f32 %v37, %v39
    %v42 = vand.u32 2147483647, %v40
    %v43 = vand.u32 2147483647, %v41
    %44 = vst [vmem:[#allocation7] sm:$0xff] %v42
    %45 = vst [vmem:[#allocation7 + $0x8] sm:$0xff] %v43
    // Predicated region
    $region18: #{tpu_custom_call.1} parent=1 // pred_check
      _
    $region19: #{tpu_custom_call.1} parent=1 // pred_check_branch
      %47 = sbr.rel (0) target = $region21
    $region20: #{tpu_custom_call.1} parent=1 // pred_region
      %s49 = ssub.s32 256, 256
      %50 = vsyncadd [#allocation4], %s49
      %s52 = sshll.u32 [#allocation7], 4
      %s53 = int_to_ptr.vmem [resolvable:$true] %s52
      %55 = dma.vmem_to_hbm [thread:$0]  %s53, 256, %s2, [#allocation4]
    $region21: #{tpu_custom_call.1} parent=1 // pred_fallthru
      _
    // Predicated region
    $region22: #{tpu_custom_call.1} parent=1 // pred_check
      _
    $region23: #{tpu_custom_call.1} parent=1 // pred_check_branch
      %57 = sbr.rel (0) target = $region25
    $region24: #{tpu_custom_call.1} parent=1 // pred_region
      %58 = dma.done [#allocation4], 256
    $region25: #{tpu_custom_call.1} parent=1 // pred_fallthru
      _
    %59 = vsyncpa [#allocation3], 1
    %60 = vsyncpa [#allocation6], 1
    %61 = vsyncpa [#allocation4], 1

</llo_original>
